<compile_context>
chip_gen: v6e
topology: v6e:2x2x1
jax: 0.10.0
libtpu: 0.0.40
codegen_flags: <defaults>
</compile_context>

<pallas_src>
import functools
import math

import jax
import jax.numpy as jnp
import numpy as np
from jax.experimental import pallas as pl
from jax.experimental.pallas import tpu as pltpu


# --------------------------------------------------------------------------
# Kernel
# --------------------------------------------------------------------------
def _flash_step(q_ref, k_ref, v_ref, o_ref, m_sc, l_sc, acc_sc, vl_ref):
    """One (batch-tile, Q-tile, K-tile) step of online-softmax attention.

    q_ref  : (BB, TQ, D)
    k_ref  : (BB, TK, D)
    v_ref  : (BB, TK, Vp)
    o_ref  : (BB, TQ, Vp)
    vl_ref : (BB, TQ, 1) int32 valid lengths, or None (no masking)
    scratch: m_sc/l_sc (BB, TQ, 1) f32, acc_sc (BB, TQ, Vp) f32
    """
    ki = pl.program_id(2)
    n_k = pl.num_programs(2)

    @pl.when(ki == 0)
    def _():
        m_sc[...] = jnp.full_like(m_sc, -jnp.inf)
        l_sc[...] = jnp.zeros_like(l_sc)
        acc_sc[...] = jnp.zeros_like(acc_sc)

    q = q_ref[...]
    # Fold 1/sqrt(d) into q (cheaper than scaling the (TQ, TK) scores).
    scale = jnp.array(1.0 / math.sqrt(q.shape[-1]), dtype=q.dtype)
    # scores tile: contract D with D (no explicit transpose), f32 accumulate.
    s = jnp.einsum("bqd,bkd->bqk", q * scale, k_ref[...],
                   preferred_element_type=jnp.float32)       # (BB, TQ, TK)

    if vl_ref is not None:
        # masked_softmax semantics: masked positions get the value -1e6.
        tk = s.shape[-1]
        col = jax.lax.broadcasted_iota(jnp.int32, s.shape, dimension=2) + ki * tk
        s = jnp.where(col < vl_ref[...], s, jnp.float32(-1.0e6))

    # Online softmax update.
    m_prev = m_sc[...]
    m_new = jnp.maximum(m_prev, jnp.max(s, axis=-1, keepdims=True))
    alpha = jnp.exp(m_prev - m_new)
    p = jnp.exp(s - m_new)
    l_sc[...] = alpha * l_sc[...] + jnp.sum(p, axis=-1, keepdims=True)
    acc_sc[...] = alpha * acc_sc[...] + jnp.einsum(
        "bqk,bkv->bqv", p.astype(v_ref.dtype), v_ref[...],
        preferred_element_type=jnp.float32)
    m_sc[...] = m_new

    @pl.when(ki == n_k - 1)
    def _():
        inv = pl.reciprocal(l_sc[...], approx=True)
        o_ref[...] = (acc_sc[...] * inv).astype(o_ref.dtype)


def _kernel_masked(vl_ref, q_ref, k_ref, v_ref, o_ref, m_sc, l_sc, acc_sc):
    _flash_step(q_ref, k_ref, v_ref, o_ref, m_sc, l_sc, acc_sc, vl_ref)


def _kernel_unmasked(q_ref, k_ref, v_ref, o_ref, m_sc, l_sc, acc_sc):
    _flash_step(q_ref, k_ref, v_ref, o_ref, m_sc, l_sc, acc_sc, None)


# --------------------------------------------------------------------------
# Wrapper
# --------------------------------------------------------------------------
def _round_up(n, m):
    return ((n + m - 1) // m) * m


def _pick_bb(B, TQ, TK, D, Vp, itemsize):
    """Batch-tile size: grow until the MXU M dim is decent or VMEM is tight."""
    budget = 8 * 1024 * 1024  # conservative; leaves double-buffer headroom
    best = 1
    for bb in range(1, B + 1):
        if B % bb:
            continue
        per = bb * (2 * (TQ * D + TK * D + TK * Vp + TQ * Vp) * itemsize
                    + TQ * (Vp + 2) * 4 + TQ * TK * 4)
        if per > budget:
            break
        best = bb
        if bb * TQ >= 256:
            break
    return best


def dot_product_attention(queries, keys, values, valid_lens=None):
    B, Q, D = queries.shape
    _, K, _ = keys.shape
    V = values.shape[-1]
    dtype = queries.dtype

    # ---- tile sizes & padding (keep everything (8,128)-aligned) -----------
    TQ = 256 if Q >= 256 else _round_up(Q, 8)
    TK = 512 if K >= 512 else _round_up(K, 8)
    Qp = _round_up(Q, TQ)
    Kp = _round_up(K, TK)
    Vp = _round_up(V, 128)          # lane-dense output stores

    q_p = queries if Qp == Q else jnp.pad(queries, ((0, 0), (0, Qp - Q), (0, 0)))
    k_p = keys if Kp == K else jnp.pad(keys, ((0, 0), (0, Kp - K), (0, 0)))
    v_p = values
    if Kp != K or Vp != V:
        v_p = jnp.pad(values, ((0, 0), (0, Kp - K), (0, Vp - V)))

    # Masking is needed if the module asked for it OR if K got padded
    # (padded key columns must not receive probability mass).
    use_mask = (valid_lens is not None) or (Kp != K)

    if use_mask:
        # valid_lens -> per-(batch, query) int32 lengths, shape (B, Qp, 1),
        # mirroring PyTorch masked_softmax (None / 1-D per-batch / 2-D per-query).
        if valid_lens is None:
            vl = jnp.full((B, Q), K, dtype=jnp.int32)
        else:
            vl = valid_lens.astype(jnp.int32)
            if vl.ndim == 1:
                vl = jnp.broadcast_to(vl[:, None], (B, Q))
            else:
                vl = vl.reshape(B, Q)
            vl = jnp.minimum(vl, K)     # same semantics; keeps padded cols masked
        if Qp != Q:
            vl = jnp.pad(vl, ((0, 0), (0, Qp - Q)), constant_values=K)
        vl = vl[..., None]              # (B, Qp, 1)

    itemsize = jnp.dtype(dtype).itemsize
    BB = _pick_bb(B, TQ, TK, D, Vp, itemsize)
    grid = (B // BB, Qp // TQ, Kp // TK)

    q_spec = pl.BlockSpec((BB, TQ, D), lambda b, qi, ki: (b, qi, 0))
    k_spec = pl.BlockSpec((BB, TK, D), lambda b, qi, ki: (b, ki, 0))
    v_spec = pl.BlockSpec((BB, TK, Vp), lambda b, qi, ki: (b, ki, 0))
    o_spec = pl.BlockSpec((BB, TQ, Vp), lambda b, qi, ki: (b, qi, 0))
    scratch = [
        pltpu.VMEM((BB, TQ, 1), jnp.float32),    # running max
        pltpu.VMEM((BB, TQ, 1), jnp.float32),    # running denominator
        pltpu.VMEM((BB, TQ, Vp), jnp.float32),   # output accumulator
    ]

    if use_mask:
        kernel = _kernel_masked
        in_specs = [pl.BlockSpec((BB, TQ, 1), lambda b, qi, ki: (b, qi, 0)),
                    q_spec, k_spec, v_spec]
        args = (vl, q_p, k_p, v_p)
    else:
        kernel = _kernel_unmasked
        in_specs = [q_spec, k_spec, v_spec]
        args = (q_p, k_p, v_p)

    grid_spec = pltpu.PrefetchScalarGridSpec(
        num_scalar_prefetch=0,
        grid=grid,
        in_specs=in_specs,
        out_specs=o_spec,
        scratch_shapes=scratch,
    )

    out = pl.pallas_call(
        kernel,
        out_shape=jax.ShapeDtypeStruct((B, Qp, Vp), dtype),
        grid_spec=grid_spec,
        compiler_params=pltpu.CompilerParams(
            dimension_semantics=("parallel", "parallel", "arbitrary")),
    )(*args)

    if Qp != Q or Vp != V:
        out = out[:, :Q, :V]
    return out


# --------------------------------------------------------------------------
# Pure-JAX reference mirroring the PyTorch module exactly.
# --------------------------------------------------------------------------
def _reference(queries, keys, values, valid_lens=None):
    d = queries.shape[-1]
    scores = jnp.einsum("bqd,bkd->bqk", queries, keys) / math.sqrt(d)
    if valid_lens is not None:
        K = scores.shape[-1]
        col = jnp.arange(K)
        if valid_lens.ndim == 1:
            mask = col[None, None, :] < valid_lens[:, None, None]
        else:
            mask = col[None, None, :] < valid_lens[:, :, None]
        scores = jnp.where(mask, scores, -1.0e6)
    w = jax.nn.softmax(scores, axis=-1)
    return jnp.einsum("bqk,bkv->bqv", w, values)


if __name__ == "__main__":
    # Small shapes consistent with the module's forward:
    # queries (B, Q, D), keys (B, K, D), values (B, K, V)
    B, Q, K, D, V = 2, 8, 8, 32, 32

    key = jax.random.PRNGKey(0)
    kq, kk, kv = jax.random.split(key, 3)
    queries = jax.random.normal(kq, (B, Q, D), dtype=jnp.float32)
    keys = jax.random.normal(kk, (B, K, D), dtype=jnp.float32)
    values = jax.random.normal(kv, (B, K, V), dtype=jnp.float32)

    # Tolerance slightly relaxed vs 1e-5 because of approx reciprocal (EUP).
    rtol = atol = 2e-3

    # 1-D (per-batch) valid_lens.
    valid_lens = jnp.array([3, 6], dtype=jnp.int32)
    out = jax.block_until_ready(
        dot_product_attention(queries, keys, values, valid_lens))
    ref = _reference(queries, keys, values, valid_lens)
    np.testing.assert_allclose(np.asarray(out), np.asarray(ref),
                               rtol=rtol, atol=atol)

    # valid_lens=None path (unmasked kernel variant).
    out2 = jax.block_until_ready(dot_product_attention(queries, keys, values))
    ref2 = _reference(queries, keys, values, None)
    np.testing.assert_allclose(np.asarray(out2), np.asarray(ref2),
                               rtol=rtol, atol=atol)

    # 2-D (per-query) valid_lens path.
    vl2 = jnp.clip(jnp.arange(B * Q, dtype=jnp.int32).reshape(B, Q) % K + 1,
                   1, K)
    out3 = jax.block_until_ready(
        dot_product_attention(queries, keys, values, vl2))
    ref3 = _reference(queries, keys, values, vl2)
    np.testing.assert_allclose(np.asarray(out3), np.asarray(ref3),
                               rtol=rtol, atol=atol)

    print("KERNEL_OK")
</pallas_src>

<mosaic_0001>
module attributes {stable_mosaic.version = 11 : i64} {
  func.func @_kernel_masked(%arg0: i32, %arg1: i32, %arg2: i32, %arg3: memref<2x8x1xi32, #tpu.memory_space<vmem>>, %arg4: memref<2x8x32xf32, #tpu.memory_space<vmem>>, %arg5: memref<2x8x32xf32, #tpu.memory_space<vmem>>, %arg6: memref<2x8x128xf32, #tpu.memory_space<vmem>>, %arg7: memref<2x8x128xf32, #tpu.memory_space<vmem>>, %arg8: memref<2x8x1xf32, #tpu.memory_space<vmem>>, %arg9: memref<2x8x1xf32, #tpu.memory_space<vmem>>, %arg10: memref<2x8x128xf32, #tpu.memory_space<vmem>>) attributes {dimension_semantics = [#tpu.dimension_semantics<parallel>, #tpu.dimension_semantics<parallel>, #tpu.dimension_semantics<arbitrary>], iteration_bounds = array<i64: 1, 1, 1>, scalar_prefetch = 0 : i64, scratch_operands = 3 : i64, tpu.core_type = #tpu.core_type<tc>, window_params = [{transform_indices = @transform_0, window_bounds = array<i64: 2, 8, 1>}, {transform_indices = @transform_1, window_bounds = array<i64: 2, 8, 32>}, {transform_indices = @transform_2, window_bounds = array<i64: 2, 8, 32>}, {transform_indices = @transform_3, window_bounds = array<i64: 2, 8, 128>}, {transform_indices = @transform_4, window_bounds = array<i64: 2, 8, 128>}]} {
    %c0_i32 = arith.constant 0 : i32
    %0 = arith.cmpi eq, %arg2, %c0_i32 : i32
    %1 = arith.extui %0 : i1 to i32
    %c0_i32_0 = arith.constant 0 : i32
    %2 = arith.cmpi ne, %1, %c0_i32_0 : i32
    scf.if %2 {
      %cst_37 = arith.constant 0xFF800000 : f32
      %43 = vector.broadcast %cst_37 : f32 to vector<2x8x1xf32>
      %c0_38 = arith.constant 0 : index
      %c0_39 = arith.constant 0 : index
      %c0_40 = arith.constant 0 : index
      %44 = vector.load %arg8[%c0_38, %c0_39, %c0_40] : memref<2x8x1xf32, #tpu.memory_space<vmem>>, vector<2x8x1xf32>
      tpu.vector_store %arg8[%c0_38, %c0_39, %c0_40], %43 {strides = array<i32>} : memref<2x8x1xf32, #tpu.memory_space<vmem>>, vector<2x8x1xf32>,
      %cst_41 = arith.constant 0.000000e+00 : f32
      %45 = vector.broadcast %cst_41 : f32 to vector<2x8x1xf32>
      %c0_42 = arith.constant 0 : index
      %c0_43 = arith.constant 0 : index
      %c0_44 = arith.constant 0 : index
      %46 = vector.load %arg9[%c0_42, %c0_43, %c0_44] : memref<2x8x1xf32, #tpu.memory_space<vmem>>, vector<2x8x1xf32>
      tpu.vector_store %arg9[%c0_42, %c0_43, %c0_44], %45 {strides = array<i32>} : memref<2x8x1xf32, #tpu.memory_space<vmem>>, vector<2x8x1xf32>,
      %cst_45 = arith.constant 0.000000e+00 : f32
      %47 = vector.broadcast %cst_45 : f32 to vector<2x8x128xf32>
      %c0_46 = arith.constant 0 : index
      %c0_47 = arith.constant 0 : index
      %c0_48 = arith.constant 0 : index
      %48 = vector.load %arg10[%c0_46, %c0_47, %c0_48] : memref<2x8x128xf32, #tpu.memory_space<vmem>>, vector<2x8x128xf32>
      tpu.vector_store %arg10[%c0_46, %c0_47, %c0_48], %47 {strides = array<i32>} : memref<2x8x128xf32, #tpu.memory_space<vmem>>, vector<2x8x128xf32>,
    } else {
    }
    %c0 = arith.constant 0 : index
    %c0_1 = arith.constant 0 : index
    %c0_2 = arith.constant 0 : index
    %3 = vector.load %arg4[%c0, %c0_1, %c0_2] : memref<2x8x32xf32, #tpu.memory_space<vmem>>, vector<2x8x32xf32>
    %cst = arith.constant 0.176776692 : f32
    %4 = vector.broadcast %cst : f32 to vector<2x8x32xf32>
    %5 = arith.mulf %3, %4 : vector<2x8x32xf32>
    %c0_3 = arith.constant 0 : index
    %c0_4 = arith.constant 0 : index
    %c0_5 = arith.constant 0 : index
    %6 = vector.load %arg5[%c0_3, %c0_4, %c0_5] : memref<2x8x32xf32, #tpu.memory_space<vmem>>, vector<2x8x32xf32>
    "tpu.trace_start"() <{level = 10 : i32, message = "bqd,bkd->bqk"}> : () -> ()
    %cst_6 = arith.constant dense<0.000000e+00> : vector<2x8x8xf32>
    %7 = tpu.matmul %5, %6, %cst_6 {dimension_numbers = #tpu.dot_dimension_numbers<[2], [2], [1], [1], [0, 0, 0, 1, 1, 1], [0], [0]>} : vector<2x8x32xf32>, vector<2x8x32xf32>, vector<2x8x8xf32> -> vector<2x8x8xf32>
    "tpu.trace_stop"() : () -> ()
    %8 = tpu.iota {dimensions = array<i32: 2>} : vector<2x8x8xi32>
    %c8_i32 = arith.constant 8 : i32
    %9 = arith.muli %arg2, %c8_i32 : i32
    %10 = vector.broadcast %9 : i32 to vector<2x8x8xi32>
    %11 = arith.addi %8, %10 : vector<2x8x8xi32>
    %c0_7 = arith.constant 0 : index
    %c0_8 = arith.constant 0 : index
    %c0_9 = arith.constant 0 : index
    %12 = vector.load %arg3[%c0_7, %c0_8, %c0_9] : memref<2x8x1xi32, #tpu.memory_space<vmem>>, vector<2x8x1xi32>
    %13 = vector.broadcast %12 : vector<2x8x1xi32> to vector<2x8x8xi32>
    %14 = arith.cmpi slt, %11, %13 : vector<2x8x8xi32>
    %cst_10 = arith.constant -1.000000e+06 : f32
    %15 = vector.broadcast %cst_10 : f32 to vector<2x8x8xf32>
    %16 = arith.select %14, %7, %15 : vector<2x8x8xi1>, vector<2x8x8xf32>
    %c0_11 = arith.constant 0 : index
    %c0_12 = arith.constant 0 : index
    %c0_13 = arith.constant 0 : index
    %17 = vector.load %arg8[%c0_11, %c0_12, %c0_13] : memref<2x8x1xf32, #tpu.memory_space<vmem>>, vector<2x8x1xf32>
    %cst_14 = arith.constant dense<0xFF800000> : vector<2x8xf32>
    %18 = vector.multi_reduction <maximumf>, %16, %cst_14 [2] : vector<2x8x8xf32> to vector<2x8xf32>
    %19 = vector.shape_cast %18 : vector<2x8xf32> to vector<2x8x1xf32>
    %20 = arith.maximumf %17, %19 : vector<2x8x1xf32>
    %21 = arith.subf %17, %20 : vector<2x8x1xf32>
    %22 = math.exp %21 : vector<2x8x1xf32>
    %23 = vector.broadcast %20 : vector<2x8x1xf32> to vector<2x8x8xf32>
    %24 = arith.subf %16, %23 : vector<2x8x8xf32>
    %25 = math.exp %24 : vector<2x8x8xf32>
    %c0_15 = arith.constant 0 : index
    %c0_16 = arith.constant 0 : index
    %c0_17 = arith.constant 0 : index
    %26 = vector.load %arg9[%c0_15, %c0_16, %c0_17] : memref<2x8x1xf32, #tpu.memory_space<vmem>>, vector<2x8x1xf32>
    %27 = arith.mulf %22, %26 : vector<2x8x1xf32>
    %cst_18 = arith.constant dense<0.000000e+00> : vector<2x8xf32>
    %28 = vector.multi_reduction <add>, %25, %cst_18 [2] : vector<2x8x8xf32> to vector<2x8xf32>
    %29 = vector.shape_cast %28 : vector<2x8xf32> to vector<2x8x1xf32>
    %30 = arith.addf %27, %29 : vector<2x8x1xf32>
    %c0_19 = arith.constant 0 : index
    %c0_20 = arith.constant 0 : index
    %c0_21 = arith.constant 0 : index
    %31 = vector.load %arg9[%c0_19, %c0_20, %c0_21] : memref<2x8x1xf32, #tpu.memory_space<vmem>>, vector<2x8x1xf32>
    tpu.vector_store %arg9[%c0_19, %c0_20, %c0_21], %30 {strides = array<i32>} : memref<2x8x1xf32, #tpu.memory_space<vmem>>, vector<2x8x1xf32>,
    %c0_22 = arith.constant 0 : index
    %c0_23 = arith.constant 0 : index
    %c0_24 = arith.constant 0 : index
    %32 = vector.load %arg10[%c0_22, %c0_23, %c0_24] : memref<2x8x128xf32, #tpu.memory_space<vmem>>, vector<2x8x128xf32>
    %33 = vector.broadcast %22 : vector<2x8x1xf32> to vector<2x8x128xf32>
    %34 = arith.mulf %33, %32 : vector<2x8x128xf32>
    %c0_25 = arith.constant 0 : index
    %c0_26 = arith.constant 0 : index
    %c0_27 = arith.constant 0 : index
    %35 = vector.load %arg6[%c0_25, %c0_26, %c0_27] : memref<2x8x128xf32, #tpu.memory_space<vmem>>, vector<2x8x128xf32>
    "tpu.trace_start"() <{level = 10 : i32, message = "bqk,bkv->bqv"}> : () -> ()
    %cst_28 = arith.constant dense<0.000000e+00> : vector<2x8x128xf32>
    %36 = tpu.matmul %25, %35, %cst_28 {dimension_numbers = #tpu.dot_dimension_numbers<[2], [1], [1], [2], [0, 0, 0, 1, 1, 2], [0], [0]>} : vector<2x8x8xf32>, vector<2x8x128xf32>, vector<2x8x128xf32> -> vector<2x8x128xf32>
    "tpu.trace_stop"() : () -> ()
    %37 = arith.addf %34, %36 : vector<2x8x128xf32>
    %c0_29 = arith.constant 0 : index
    %c0_30 = arith.constant 0 : index
    %c0_31 = arith.constant 0 : index
    %38 = vector.load %arg10[%c0_29, %c0_30, %c0_31] : memref<2x8x128xf32, #tpu.memory_space<vmem>>, vector<2x8x128xf32>
    tpu.vector_store %arg10[%c0_29, %c0_30, %c0_31], %37 {strides = array<i32>} : memref<2x8x128xf32, #tpu.memory_space<vmem>>, vector<2x8x128xf32>,
    %c0_32 = arith.constant 0 : index
    %c0_33 = arith.constant 0 : index
    %c0_34 = arith.constant 0 : index
    %39 = vector.load %arg8[%c0_32, %c0_33, %c0_34] : memref<2x8x1xf32, #tpu.memory_space<vmem>>, vector<2x8x1xf32>
    tpu.vector_store %arg8[%c0_32, %c0_33, %c0_34], %20 {strides = array<i32>} : memref<2x8x1xf32, #tpu.memory_space<vmem>>, vector<2x8x1xf32>,
    %c0_i32_35 = arith.constant 0 : i32
    %40 = arith.cmpi eq, %arg2, %c0_i32_35 : i32
    %41 = arith.extui %40 : i1 to i32
    %c0_i32_36 = arith.constant 0 : i32
    %42 = arith.cmpi ne, %41, %c0_i32_36 : i32
    scf.if %42 {
      %c0_37 = arith.constant 0 : index
      %c0_38 = arith.constant 0 : index
      %c0_39 = arith.constant 0 : index
      %43 = vector.load %arg9[%c0_37, %c0_38, %c0_39] : memref<2x8x1xf32, #tpu.memory_space<vmem>>, vector<2x8x1xf32>
      %44 = tpu.reciprocal %43 {approx = true} : vector<2x8x1xf32> -> vector<2x8x1xf32>
      %c0_40 = arith.constant 0 : index
      %c0_41 = arith.constant 0 : index
      %c0_42 = arith.constant 0 : index
      %45 = vector.load %arg10[%c0_40, %c0_41, %c0_42] : memref<2x8x128xf32, #tpu.memory_space<vmem>>, vector<2x8x128xf32>
      %46 = vector.broadcast %44 : vector<2x8x1xf32> to vector<2x8x128xf32>
      %47 = arith.mulf %45, %46 : vector<2x8x128xf32>
      %c0_43 = arith.constant 0 : index
      %c0_44 = arith.constant 0 : index
      %c0_45 = arith.constant 0 : index
      %48 = vector.load %arg7[%c0_43, %c0_44, %c0_45] : memref<2x8x128xf32, #tpu.memory_space<vmem>>, vector<2x8x128xf32>
      tpu.vector_store %arg7[%c0_43, %c0_44, %c0_45], %47 {strides = array<i32>} : memref<2x8x128xf32, #tpu.memory_space<vmem>>, vector<2x8x128xf32>,
    } else {
    }
    return
  }
  func.func @transform_0(%arg0: i32, %arg1: i32, %arg2: i32) -> (i32, i32, i32) {
    %c0_i32 = arith.constant 0 : i32
    %c0_i32_0 = arith.constant 0 : i32
    return %arg0, %arg1, %c0_i32 : i32, i32, i32
  }
  func.func @transform_1(%arg0: i32, %arg1: i32, %arg2: i32) -> (i32, i32, i32) {
    %c0_i32 = arith.constant 0 : i32
    %c0_i32_0 = arith.constant 0 : i32
    return %arg0, %arg1, %c0_i32 : i32, i32, i32
  }
  func.func @transform_2(%arg0: i32, %arg1: i32, %arg2: i32) -> (i32, i32, i32) {
    %c0_i32 = arith.constant 0 : i32
    %c0_i32_0 = arith.constant 0 : i32
    return %arg0, %arg2, %c0_i32 : i32, i32, i32
  }
  func.func @transform_3(%arg0: i32, %arg1: i32, %arg2: i32) -> (i32, i32, i32) {
    %c0_i32 = arith.constant 0 : i32
    %c0_i32_0 = arith.constant 0 : i32
    return %arg0, %arg2, %c0_i32 : i32, i32, i32
  }
  func.func @transform_4(%arg0: i32, %arg1: i32, %arg2: i32) -> (i32, i32, i32) {
    %c0_i32 = arith.constant 0 : i32
    %c0_i32_0 = arith.constant 0 : i32
    return %arg0, %arg1, %c0_i32 : i32, i32, i32
  }
}

</mosaic_0001>

<llo_original>
// kernel: tpu_custom_call.1
$region0: #{tpu_custom_call.1}
  #allocation0 [shape = 'u32[]', space=smem, size = 0x4, offset = 0x4, fixed_abs, tag = 'smem constant byte address 0x4 - core index']
  #allocation1 [shape = 'u32[144,128]{1,0:T(1,128)}', space=vmem, size = 0x12000, scoped, tag = 'internal scratch']
  #allocation2 [shape = 'f32[2,8,1]{2,1,0:T(8,128)}', space=vmem, size = 0x2000, scoped, tag = 'scratch operand']
  #allocation3 [shape = 'f32[2,8,1]{2,1,0:T(8,128)}', space=vmem, size = 0x2000, scoped, tag = 'scratch operand']
  #allocation4 [shape = 'f32[2,8,128]{2,1,0:T(8,128)}', space=vmem, size = 0x2000, scoped, tag = 'scratch operand']
  %s0 = inlined_call_operand.vmem [shape: s32[2,8,1], index: 0, kind: input, shape index: {}]
  %s1 = inlined_call_operand.vmem [shape: f32[2,8,32], index: 1, kind: input, shape index: {}]
  %s2 = inlined_call_operand.hbm [shape: f32[2,8,32], index: 2, kind: input, shape index: {}]
  %s3 = inlined_call_operand.hbm [shape: f32[2,8,128], index: 3, kind: input, shape index: {}]
  %s4 = inlined_call_operand.hbm [shape: f32[2,8,128], index: 4, kind: output, shape index: {}]
  %s5 = sld [smem:[#allocation0]]
  $region42: #{tpu_custom_call.1} parent=0
    _
  %s7 = ssub.s32 1, %s5
  %s8 = scalar_select 0, %s7, %s5
  $region1: #{tpu_custom_call.1} parent=0
    #allocation5 [shape = 'u8[8192]{0}', space=vmem, size = 0x2000, scoped, tag = 'input window, operand 2, single buffered']
    #allocation6 [shape = 's32[1]{0}', space=sflag, size = 0x4, scoped, tag = 'scoped memory for tpu_custom_call.1']
    #allocation7 [shape = 's32[1]{0}', space=sflag, size = 0x4, scoped, tag = 'scoped memory for tpu_custom_call.1']
    #allocation8 [shape = 'u8[8192]{0}', space=vmem, size = 0x2000, scoped, tag = 'input window, operand 3, single buffered']
    #allocation9 [shape = 's32[1]{0}', space=sflag, size = 0x4, scoped, tag = 'scoped memory for tpu_custom_call.1']
    #allocation10 [shape = 'u8[8192]{0}', space=vmem, size = 0x2000, scoped, tag = 'output window, operand 0, single buffered']
    %9 = vsyncpa [#allocation6], 0
    %10 = vsyncpa [#allocation9], 0
    %11 = vsyncpa [#allocation7], 0
    // Predicated region
    $region2: #{tpu_custom_call.1} parent=1 // pred_check
      _
    $region3: #{tpu_custom_call.1} parent=1 // pred_check_branch
      %13 = sbr.rel (0) target = $region5
    $region4: #{tpu_custom_call.1} parent=1 // pred_region
      _
    $region5: #{tpu_custom_call.1} parent=1 // pred_fallthru
      _
    // Predicated region
    $region6: #{tpu_custom_call.1} parent=1 // pred_check
      _
    $region7: #{tpu_custom_call.1} parent=1 // pred_check_branch
      %15 = sbr.rel (0) target = $region9
    $region8: #{tpu_custom_call.1} parent=1 // pred_region
      _
    $region9: #{tpu_custom_call.1} parent=1 // pred_fallthru
      _
    // Predicated region
    $region10: #{tpu_custom_call.1} parent=1 // pred_check
      _
    $region11: #{tpu_custom_call.1} parent=1 // pred_check_branch
      %17 = sbr.rel (0) target = $region13
    $region12: #{tpu_custom_call.1} parent=1 // pred_region
      %s19 = ssub.s32 256, 256
      %20 = vsyncadd [#allocation6], %s19
      %s21 = sshll.u32 [#allocation5], 4
      %s22 = int_to_ptr.vmem [resolvable:$true] %s21
      %27 = dma.hbm_to_vmem [thread:$0]  %s2, 256, %s22, [#allocation6], 128, 128, 8
    $region13: #{tpu_custom_call.1} parent=1 // pred_fallthru
      _
    // Predicated region
    $region14: #{tpu_custom_call.1} parent=1 // pred_check
      _
    $region15: #{tpu_custom_call.1} parent=1 // pred_check_branch
      %29 = sbr.rel (0) target = $region17
    $region16: #{tpu_custom_call.1} parent=1 // pred_region
      %s31 = ssub.s32 256, 256
      %32 = vsyncadd [#allocation9], %s31
      %s33 = sshll.u32 [#allocation8], 4
      %s34 = int_to_ptr.vmem [resolvable:$true] %s33
      %39 = dma.hbm_to_vmem [thread:$0]  %s3, 256, %s34, [#allocation9], 128, 128, 8
    $region17: #{tpu_custom_call.1} parent=1 // pred_fallthru
      _
    // Predicated region
    $region18: #{tpu_custom_call.1} parent=1 // pred_check
      _
    $region19: #{tpu_custom_call.1} parent=1 // pred_check_branch
      %41 = sbr.rel (0) target = $region21
    $region20: #{tpu_custom_call.1} parent=1 // pred_region
      %42 = dma.done [#allocation6], 256
    $region21: #{tpu_custom_call.1} parent=1 // pred_fallthru
      _
    // Predicated region
    $region22: #{tpu_custom_call.1} parent=1 // pred_check
      _
    $region23: #{tpu_custom_call.1} parent=1 // pred_check_branch
      %44 = sbr.rel (0) target = $region25
    $region24: #{tpu_custom_call.1} parent=1 // pred_region
      %45 = dma.done [#allocation9], 256
    $region25: #{tpu_custom_call.1} parent=1 // pred_fallthru
      _
    %p46 = scmp.eq.s32.totalorder 0, 0
    // Predicated region
    $region26: #{tpu_custom_call.1} parent=1 // pred_check
      %p47 = pneg %p46
    $region27: #{tpu_custom_call.1} parent=1 // pred_check_branch
      %49 = sbr.rel (%p47) target = $region29
    $region28: #{tpu_custom_call.1} parent=1 // pred_region
      %vm50 = vcmask 7168
      %51 = vst.msk [vmem:[#allocation2] sm:$0xff] %vm50, -inf
      %52 = vst.msk [vmem:[#allocation2 + $0x8] sm:$0xff] %vm50, -inf
      %53 = vst.msk [vmem:[#allocation3] sm:$0xff] %vm50, 0.0
      %54 = vst.msk [vmem:[#allocation3 + $0x8] sm:$0xff] %vm50, 0.0
      %55 = vst [vmem:[#allocation4] sm:$0xff] 0.0
      %56 = vst [vmem:[#allocation4 + $0x8] sm:$0xff] 0.0
    $region29: #{tpu_custom_call.1} parent=1 // pred_fallthru
      _
    %v57 = vld [vmem:[%s1] sm:$0xff]
    %v58 = vld [vmem:[%s1 + $0x8] sm:$0xff]
    %v59 = vmul.f32 %v57, 0.17677669
    %v60 = vmul.f32 %v58, 0.17677669
    %v61 = vld [vmem:[#allocation5] sm:$0xff]
    %v62 = vld [vmem:[#allocation5 + $0x8] sm:$0xff]
    %vm63 = vcmask 261120
    %v65 = vsel %vm63, %v59, 0
    %v68 = vsel %vm63, %v61, 0
    %70 = vmatprep.subr.mxu0 0.0
    %71 = vmatpush1.xpose.msra.mxu0 0.0
    %72 = vmatprep.subr.mxu0 0.0
    %73 = vmatpush1.xpose.msra.mxu0 0.0
    %74 = vmatprep.subr.mxu0 0.0
    %75 = vmatpush1.xpose.msra.mxu0 0.0
    %76 = vmatprep.subr.mxu0 0.0
    %77 = vmatpush1.xpose.msra.mxu0 0.0
    %78 = vmatprep.subr.mxu0 0.0
    %79 = vmatpush1.xpose.msra.mxu0 0.0
    %80 = vmatprep.subr.mxu0 0.0
    %81 = vmatpush1.xpose.msra.mxu0 0.0
    %82 = vmatprep.subr.mxu0 0.0
    %83 = vmatpush1.xpose.msra.mxu0 0.0
    %84 = vmatprep.subr.mxu0 0.0
    %85 = vmatpush1.xpose.msra.mxu0 0.0
    %86 = vmatprep.subr.mxu0 0.0
    %87 = vmatpush1.xpose.msra.mxu0 0.0
    %88 = vmatprep.subr.mxu0 0.0
    %89 = vmatpush1.xpose.msra.mxu0 0.0
    %90 = vmatprep.subr.mxu0 0.0
    %91 = vmatpush1.xpose.msra.mxu0 0.0
    %92 = vmatprep.subr.mxu0 0.0
    %93 = vmatpush1.xpose.msra.mxu0 0.0
    %94 = vmatprep.subr.mxu0 0.0
    %95 = vmatpush1.xpose.msra.mxu0 0.0
    %96 = vmatprep.subr.mxu0 0.0
    %97 = vmatpush1.xpose.msra.mxu0 0.0
    %98 = vmatprep.subr.mxu0 0.0
    %99 = vmatpush1.xpose.msra.mxu0 0.0
    %100 = vmatprep.subr.mxu0 0.0
    %101 = vmatpush1.xpose.msra.mxu0 %v68
    %102 = vmatprep.subr.mxu0 0.0
    %103 = vmatpush2.xpose.msra.mxu0 0.0
    %104 = vmatprep.subr.mxu0 0.0
    %105 = vmatpush2.xpose.msra.mxu0 0.0
    %106 = vmatprep.subr.mxu0 0.0
    %107 = vmatpush2.xpose.msra.mxu0 0.0
    %108 = vmatprep.subr.mxu0 0.0
    %109 = vmatpush2.xpose.msra.mxu0 0.0
    %110 = vmatprep.subr.mxu0 0.0
    %111 = vmatpush2.xpose.msra.mxu0 0.0
    %112 = vmatprep.subr.mxu0 0.0
    %113 = vmatpush2.xpose.msra.mxu0 0.0
    %114 = vmatprep.subr.mxu0 0.0
    %115 = vmatpush2.xpose.msra.mxu0 0.0
    %116 = vmatprep.subr.mxu0 0.0
    %117 = vmatpush2.xpose.msra.mxu0 0.0
    %118 = vmatprep.subr.mxu0 0.0
    %119 = vmatpush2.xpose.msra.mxu0 0.0
    %120 = vmatprep.subr.mxu0 0.0
    %121 = vmatpush2.xpose.msra.mxu0 0.0
    %122 = vmatprep.subr.mxu0 0.0
    %123 = vmatpush2.xpose.msra.mxu0 0.0
    %124 = vmatprep.subr.mxu0 0.0
    %125 = vmatpush2.xpose.msra.mxu0 0.0
    %126 = vmatprep.subr.mxu0 0.0
    %127 = vmatpush2.xpose.msra.mxu0 0.0
    %128 = vmatprep.subr.mxu0 0.0
    %129 = vmatpush2.xpose.msra.mxu0 0.0
    %130 = vmatprep.subr.mxu0 0.0
    %131 = vmatpush2.xpose.msra.mxu0 0.0
    %132 = vmatprep.subr.mxu0 0.0
    %133 = vmatpush2.xpose.msra.mxu0 0.0
    %134 = vmatprep.mubr.f32.mxu0 0.0
    %135 = vmatmul.mubr.f32.gmra.mxu0 %v65
    %v136 = vpop.f32.mrf.mxu0
    %v137 = vadd.f32 0.0, %v136
    %v138 = vpop.f32.mrf.mxu0
    %139 = vdwg.mxu0
    %v141 = vsel %vm63, %v60, 0
    %v144 = vsel %vm63, %v62, 0
    %146 = vmatprep.subr.mxu0 0.0
    %147 = vmatpush1.xpose.msra.mxu0 0.0
    %148 = vmatprep.subr.mxu0 0.0
    %149 = vmatpush1.xpose.msra.mxu0 0.0
    %150 = vmatprep.subr.mxu0 0.0
    %151 = vmatpush1.xpose.msra.mxu0 0.0
    %152 = vmatprep.subr.mxu0 0.0
    %153 = vmatpush1.xpose.msra.mxu0 0.0
    %154 = vmatprep.subr.mxu0 0.0
    %155 = vmatpush1.xpose.msra.mxu0 0.0
    %156 = vmatprep.subr.mxu0 0.0
    %157 = vmatpush1.xpose.msra.mxu0 0.0
    %158 = vmatprep.subr.mxu0 0.0
    %159 = vmatpush1.xpose.msra.mxu0 0.0
    %160 = vmatprep.subr.mxu0 0.0
    %161 = vmatpush1.xpose.msra.mxu0 0.0
    %162 = vmatprep.subr.mxu0 0.0
    %163 = vmatpush1.xpose.msra.mxu0 0.0
    %164 = vmatprep.subr.mxu0 0.0
    %165 = vmatpush1.xpose.msra.mxu0 0.0
    %166 = vmatprep.subr.mxu0 0.0
    %167 = vmatpush1.xpose.msra.mxu0 0.0
    %168 = vmatprep.subr.mxu0 0.0
    %169 = vmatpush1.xpose.msra.mxu0 0.0
    %170 = vmatprep.subr.mxu0 0.0
    %171 = vmatpush1.xpose.msra.mxu0 0.0
    %172 = vmatprep.subr.mxu0 0.0
    %173 = vmatpush1.xpose.msra.mxu0 0.0
    %174 = vmatprep.subr.mxu0 0.0
    %175 = vmatpush1.xpose.msra.mxu0 0.0
    %176 = vmatprep.subr.mxu0 0.0
    %177 = vmatpush1.xpose.msra.mxu0 %v144
    %178 = vmatprep.subr.mxu0 0.0
    %179 = vmatpush2.xpose.msra.mxu0 0.0
    %180 = vmatprep.subr.mxu0 0.0
    %181 = vmatpush2.xpose.msra.mxu0 0.0
    %182 = vmatprep.subr.mxu0 0.0
    %183 = vmatpush2.xpose.msra.mxu0 0.0
    %184 = vmatprep.subr.mxu0 0.0
    %185 = vmatpush2.xpose.msra.mxu0 0.0
    %186 = vmatprep.subr.mxu0 0.0
    %187 = vmatpush2.xpose.msra.mxu0 0.0
    %188 = vmatprep.subr.mxu0 0.0
    %189 = vmatpush2.xpose.msra.mxu0 0.0
    %190 = vmatprep.subr.mxu0 0.0
    %191 = vmatpush2.xpose.msra.mxu0 0.0
    %192 = vmatprep.subr.mxu0 0.0
    %193 = vmatpush2.xpose.msra.mxu0 0.0
    %194 = vmatprep.subr.mxu0 0.0
    %195 = vmatpush2.xpose.msra.mxu0 0.0
    %196 = vmatprep.subr.mxu0 0.0
    %197 = vmatpush2.xpose.msra.mxu0 0.0
    %198 = vmatprep.subr.mxu0 0.0
    %199 = vmatpush2.xpose.msra.mxu0 0.0
    %200 = vmatprep.subr.mxu0 0.0
    %201 = vmatpush2.xpose.msra.mxu0 0.0
    %202 = vmatprep.subr.mxu0 0.0
    %203 = vmatpush2.xpose.msra.mxu0 0.0
    %204 = vmatprep.subr.mxu0 0.0
    %205 = vmatpush2.xpose.msra.mxu0 0.0
    %206 = vmatprep.subr.mxu0 0.0
    %207 = vmatpush2.xpose.msra.mxu0 0.0
    %208 = vmatprep.subr.mxu0 0.0
    %209 = vmatpush2.xpose.msra.mxu0 0.0
    %210 = vmatprep.mubr.f32.mxu0 0.0
    %211 = vmatmul.mubr.f32.gmra.mxu0 %v141
    %v212 = vpop.f32.mrf.mxu0
    %v213 = vadd.f32 0.0, %v212
    %v214 = vpop.f32.mrf.mxu0
    %215 = vdwg.mxu0
    %v216 = vlaneseq
    %v217 = vand.u32 %v216, 127
    %s218 = smul.u32 0, 8
    %v219 = vstv %s218
    %v220 = vadd.s32 %v217, %v219
    %v221 = vld [vmem:[%s0] sm:$0xff]
    %v222 = vld [vmem:[%s0 + $0x8] sm:$0xff]
    %223 = vset.pattern.permute.xlu0 0
    %224 = vperm.xlu0 %223, %v221
    %v225 = vpop.permute.xlu0 %224
    %226 = vset.pattern.permute.xlu0 0
    %227 = vperm.xlu0 %226, %v222
    %v228 = vpop.permute.xlu0 %227
    %vm229 = vcmp.lt.s32.totalorder %v220, %v225
    %vm230 = vcmp.lt.s32.totalorder %v220, %v228
    %v231 = vsel %vm229, %v137, -1000000.0
    %v232 = vsel %vm230, %v213, -1000000.0
    %v233 = vld [vmem:[#allocation2] sm:$0xff]
    %v234 = vld [vmem:[#allocation2 + $0x8] sm:$0xff]
    %vm235 = vcmask 64512
    %v236 = vsel %vm235, %v231, -inf
    %237 = vmax.xlane.f32.xlu0 %v236
    %v238 = vpop.xlane.xlu0 %237
    %v239 = vsel %vm235, %v232, -inf
    %240 = vmax.xlane.f32.xlu0 %v239
    %v241 = vpop.xlane.xlu0 %240
    %v242 = vmax.f32 %v233, %v238
    %v243 = vmax.f32 %v234, %v241
    %v244 = vsub.f32 %v233, %v242
    %v245 = vsub.f32 %v234, %v243
    %v246 = vmul.f32 %v244, 1.442695
    %v247 = vpow.pop %v246
    %v248 = vmul.f32 %v245, 1.442695
    %v249 = vpow.pop %v248
    %251 = vset.pattern.permute.xlu0 0
    %252 = vperm.xlu0 %251, %v242
    %v253 = vpop.permute.xlu0 %252
    %256 = vset.pattern.permute.xlu0 0
    %257 = vperm.xlu0 %256, %v243
    %v258 = vpop.permute.xlu0 %257
    %v260 = vsub.f32 %v231, %v253
    %v261 = vsub.f32 %v232, %v258
    %v262 = vmul.f32 %v260, 1.442695
    %v263 = vpow.pop %v262
    %v264 = vmul.f32 %v261, 1.442695
    %v265 = vpow.pop %v264
    %v266 = vld [vmem:[#allocation3] sm:$0xff]
    %v267 = vld [vmem:[#allocation3 + $0x8] sm:$0xff]
    %v268 = vmul.f32 %v247, %v266
    %v269 = vmul.f32 %v249, %v267
    %v270 = vsel %vm235, %v263, 0.0
    %271 = vadd.xlane.f32.xlu0 %v270
    %v272 = vpop.xlane.xlu0 %271
    %v273 = vsel %vm235, %v265, 0.0
    %274 = vadd.xlane.f32.xlu0 %v273
    %v275 = vpop.xlane.xlu0 %274
    %v276 = vadd.f32 %v268, %v272
    %v277 = vadd.f32 %v269, %v275
    %vm278 = vcmask 7168
    %279 = vst.msk [vmem:[#allocation3] sm:$0xff] %vm278, %v276
    %280 = vst.msk [vmem:[#allocation3 + $0x8] sm:$0xff] %vm278, %v277
    %v281 = vld [vmem:[#allocation4] sm:$0xff]
    %v282 = vld [vmem:[#allocation4 + $0x8] sm:$0xff]
    %284 = vset.pattern.permute.xlu0 0
    %285 = vperm.xlu0 %284, %v247
    %v286 = vpop.permute.xlu0 %285
    %289 = vset.pattern.permute.xlu0 0
    %290 = vperm.xlu0 %289, %v249
    %v291 = vpop.permute.xlu0 %290
    %v293 = vmul.f32 %v286, %v281
    %v294 = vmul.f32 %v291, %v282
    %v295 = vld [vmem:[#allocation8] sm:$0xff]
    %v296 = vld [vmem:[#allocation8 + $0x8] sm:$0xff]
    %v298 = vsel %vm235, %v263, 0
    %300 = vmatprep.subr.mxu0 0.0
    %301 = vmatpush1.msra.mxu0 0.0
    %302 = vmatprep.subr.mxu0 0.0
    %303 = vmatpush1.msra.mxu0 0.0
    %304 = vmatprep.subr.mxu0 0.0
    %305 = vmatpush1.msra.mxu0 0.0
    %306 = vmatprep.subr.mxu0 0.0
    %307 = vmatpush1.msra.mxu0 0.0
    %308 = vmatprep.subr.mxu0 0.0
    %309 = vmatpush1.msra.mxu0 0.0
    %310 = vmatprep.subr.mxu0 0.0
    %311 = vmatpush1.msra.mxu0 0.0
    %312 = vmatprep.subr.mxu0 0.0
    %313 = vmatpush1.msra.mxu0 0.0
    %314 = vmatprep.subr.mxu0 0.0
    %315 = vmatpush1.msra.mxu0 0.0
    %316 = vmatprep.subr.mxu0 0.0
    %317 = vmatpush1.msra.mxu0 0.0
    %318 = vmatprep.subr.mxu0 0.0
    %319 = vmatpush1.msra.mxu0 0.0
    %320 = vmatprep.subr.mxu0 0.0
    %321 = vmatpush1.msra.mxu0 0.0
    %322 = vmatprep.subr.mxu0 0.0
    %323 = vmatpush1.msra.mxu0 0.0
    %324 = vmatprep.subr.mxu0 0.0
    %325 = vmatpush1.msra.mxu0 0.0
    %326 = vmatprep.subr.mxu0 0.0
    %327 = vmatpush1.msra.mxu0 0.0
    %328 = vmatprep.subr.mxu0 0.0
    %329 = vmatpush1.msra.mxu0 0.0
    %330 = vmatprep.subr.mxu0 0.0
    %331 = vmatpush1.msra.mxu0 %v295
    %332 = vmatprep.subr.mxu0 0.0
    %333 = vmatpush2.msra.mxu0 0.0
    %334 = vmatprep.subr.mxu0 0.0
    %335 = vmatpush2.msra.mxu0 0.0
    %336 = vmatprep.subr.mxu0 0.0
    %337 = vmatpush2.msra.mxu0 0.0
    %338 = vmatprep.subr.mxu0 0.0
    %339 = vmatpush2.msra.mxu0 0.0
    %340 = vmatprep.subr.mxu0 0.0
    %341 = vmatpush2.msra.mxu0 0.0
    %342 = vmatprep.subr.mxu0 0.0
    %343 = vmatpush2.msra.mxu0 0.0
    %344 = vmatprep.subr.mxu0 0.0
    %345 = vmatpush2.msra.mxu0 0.0
    %346 = vmatprep.subr.mxu0 0.0
    %347 = vmatpush2.msra.mxu0 0.0
    %348 = vmatprep.subr.mxu0 0.0
    %349 = vmatpush2.msra.mxu0 0.0
    %350 = vmatprep.subr.mxu0 0.0
    %351 = vmatpush2.msra.mxu0 0.0
    %352 = vmatprep.subr.mxu0 0.0
    %353 = vmatpush2.msra.mxu0 0.0
    %354 = vmatprep.subr.mxu0 0.0
    %355 = vmatpush2.msra.mxu0 0.0
    %356 = vmatprep.subr.mxu0 0.0
    %357 = vmatpush2.msra.mxu0 0.0
    %358 = vmatprep.subr.mxu0 0.0
    %359 = vmatpush2.msra.mxu0 0.0
    %360 = vmatprep.subr.mxu0 0.0
    %361 = vmatpush2.msra.mxu0 0.0
    %362 = vmatprep.subr.mxu0 0.0
    %363 = vmatpush2.msra.mxu0 0.0
    %364 = vmatprep.mubr.f32.mxu0 0.0
    %365 = vmatmul.mubr.f32.gmra.mxu0 %v298
    %v366 = vpop.f32.mrf.mxu0
    %v367 = vadd.f32 0.0, %v366
    %v368 = vpop.f32.mrf.mxu0
    %369 = vdwg.mxu0
    %v371 = vsel %vm235, %v265, 0
    %373 = vmatprep.subr.mxu0 0.0
    %374 = vmatpush1.msra.mxu0 0.0
    %375 = vmatprep.subr.mxu0 0.0
    %376 = vmatpush1.msra.mxu0 0.0
    %377 = vmatprep.subr.mxu0 0.0
    %378 = vmatpush1.msra.mxu0 0.0
    %379 = vmatprep.subr.mxu0 0.0
    %380 = vmatpush1.msra.mxu0 0.0
    %381 = vmatprep.subr.mxu0 0.0
    %382 = vmatpush1.msra.mxu0 0.0
    %383 = vmatprep.subr.mxu0 0.0
    %384 = vmatpush1.msra.mxu0 0.0
    %385 = vmatprep.subr.mxu0 0.0
    %386 = vmatpush1.msra.mxu0 0.0
    %387 = vmatprep.subr.mxu0 0.0
    %388 = vmatpush1.msra.mxu0 0.0
    %389 = vmatprep.subr.mxu0 0.0
    %390 = vmatpush1.msra.mxu0 0.0
    %391 = vmatprep.subr.mxu0 0.0
    %392 = vmatpush1.msra.mxu0 0.0
    %393 = vmatprep.subr.mxu0 0.0
    %394 = vmatpush1.msra.mxu0 0.0
    %395 = vmatprep.subr.mxu0 0.0
    %396 = vmatpush1.msra.mxu0 0.0
    %397 = vmatprep.subr.mxu0 0.0
    %398 = vmatpush1.msra.mxu0 0.0
    %399 = vmatprep.subr.mxu0 0.0
    %400 = vmatpush1.msra.mxu0 0.0
    %401 = vmatprep.subr.mxu0 0.0
    %402 = vmatpush1.msra.mxu0 0.0
    %403 = vmatprep.subr.mxu0 0.0
    %404 = vmatpush1.msra.mxu0 %v296
    %405 = vmatprep.subr.mxu0 0.0
    %406 = vmatpush2.msra.mxu0 0.0
    %407 = vmatprep.subr.mxu0 0.0
    %408 = vmatpush2.msra.mxu0 0.0
    %409 = vmatprep.subr.mxu0 0.0
    %410 = vmatpush2.msra.mxu0 0.0
    %411 = vmatprep.subr.mxu0 0.0
    %412 = vmatpush2.msra.mxu0 0.0
    %413 = vmatprep.subr.mxu0 0.0
    %414 = vmatpush2.msra.mxu0 0.0
    %415 = vmatprep.subr.mxu0 0.0
    %416 = vmatpush2.msra.mxu0 0.0
    %417 = vmatprep.subr.mxu0 0.0
    %418 = vmatpush2.msra.mxu0 0.0
    %419 = vmatprep.subr.mxu0 0.0
    %420 = vmatpush2.msra.mxu0 0.0
    %421 = vmatprep.subr.mxu0 0.0
    %422 = vmatpush2.msra.mxu0 0.0
    %423 = vmatprep.subr.mxu0 0.0
    %424 = vmatpush2.msra.mxu0 0.0
    %425 = vmatprep.subr.mxu0 0.0
    %426 = vmatpush2.msra.mxu0 0.0
    %427 = vmatprep.subr.mxu0 0.0
    %428 = vmatpush2.msra.mxu0 0.0
    %429 = vmatprep.subr.mxu0 0.0
    %430 = vmatpush2.msra.mxu0 0.0
    %431 = vmatprep.subr.mxu0 0.0
    %432 = vmatpush2.msra.mxu0 0.0
    %433 = vmatprep.subr.mxu0 0.0
    %434 = vmatpush2.msra.mxu0 0.0
    %435 = vmatprep.subr.mxu0 0.0
    %436 = vmatpush2.msra.mxu0 0.0
    %437 = vmatprep.mubr.f32.mxu0 0.0
    %438 = vmatmul.mubr.f32.gmra.mxu0 %v371
    %v439 = vpop.f32.mrf.mxu0
    %v440 = vadd.f32 0.0, %v439
    %v441 = vpop.f32.mrf.mxu0
    %442 = vdwg.mxu0
    %v443 = vadd.f32 %v293, %v367
    %v444 = vadd.f32 %v294, %v440
    %445 = vst [vmem:[#allocation4] sm:$0xff] %v443
    %446 = vst [vmem:[#allocation4 + $0x8] sm:$0xff] %v444
    %447 = vst.msk [vmem:[#allocation2] sm:$0xff] %vm278, %v242
    %448 = vst.msk [vmem:[#allocation2 + $0x8] sm:$0xff] %vm278, %v243
    // Predicated region
    $region30: #{tpu_custom_call.1} parent=1 // pred_check
      %p449 = pneg %p46
    $region31: #{tpu_custom_call.1} parent=1 // pred_check_branch
      %451 = sbr.rel (%p449) target = $region33
    $region32: #{tpu_custom_call.1} parent=1 // pred_region
      %v452 = vld [vmem:[#allocation3] sm:$0xff]
      %v453 = vld [vmem:[#allocation3 + $0x8] sm:$0xff]
      %v454 = vrcp.pop %v452
      %v455 = vrcp.pop %v453
      %v456 = vld [vmem:[#allocation4] sm:$0xff]
      %v457 = vld [vmem:[#allocation4 + $0x8] sm:$0xff]
      %459 = vset.pattern.permute.xlu0 0
      %460 = vperm.xlu0 %459, %v454
      %v461 = vpop.permute.xlu0 %460
      %464 = vset.pattern.permute.xlu0 0
      %465 = vperm.xlu0 %464, %v455
      %v466 = vpop.permute.xlu0 %465
      %v468 = vmul.f32 %v456, %v461
      %v469 = vmul.f32 %v457, %v466
      %470 = vst [vmem:[#allocation10] sm:$0xff] %v468
      %471 = vst [vmem:[#allocation10 + $0x8] sm:$0xff] %v469
    $region33: #{tpu_custom_call.1} parent=1 // pred_fallthru
      _
    // Predicated region
    $region34: #{tpu_custom_call.1} parent=1 // pred_check
      _
    $region35: #{tpu_custom_call.1} parent=1 // pred_check_branch
      %473 = sbr.rel (0) target = $region37
    $region36: #{tpu_custom_call.1} parent=1 // pred_region
      %s475 = ssub.s32 256, 256
      %476 = vsyncadd [#allocation7], %s475
      %s477 = sshll.u32 [#allocation10], 4
      %s478 = int_to_ptr.vmem [resolvable:$true] %s477
      %483 = dma.vmem_to_hbm [thread:$0]  %s478, 256, %s4, [#allocation7], 128, 128, 8
    $region37: #{tpu_custom_call.1} parent=1 // pred_fallthru
      _
    // Predicated region
    $region38: #{tpu_custom_call.1} parent=1 // pred_check
      _
    $region39: #{tpu_custom_call.1} parent=1 // pred_check_branch
      %485 = sbr.rel (0) target = $region41
    $region40: #{tpu_custom_call.1} parent=1 // pred_region
      %486 = dma.done [#allocation7], 256
    $region41: #{tpu_custom_call.1} parent=1 // pred_fallthru
      _
    %487 = vsyncpa [#allocation6], 1
    %488 = vsyncpa [#allocation9], 1
    %489 = vsyncpa [#allocation7], 1

</llo_original>
